<compile_context>
chip_gen: v6e
topology: v6e:2x2x1
jax: 0.10.0
libtpu: 0.0.40
codegen_flags: <defaults>
</compile_context>

<pallas_src>
import functools

import jax
import jax.numpy as jnp
from jax.experimental import pallas as pl
from jax.experimental.pallas import tpu as pltpu

_MIB = 1024 * 1024


def _round_up(x, m):
    return (x + m - 1) // m * m


def _silu(x):
    return x * jax.nn.sigmoid(x)


# --------------------------------------------------------------------------
# Generation-aware tuning
# --------------------------------------------------------------------------
# gen -> (tm_target, tk_target, vmem_budget_bytes)
_GEN_TABLE = {
    "v5e": (256, 512, 100 * _MIB),     # ridge ~240 FLOP/B; spend VMEM on TK
    "v6e": (1024, 256, 96 * _MIB),     # ridge ~650-700 FLOP/B; raise TM
    "v7x": (512, 256, 46 * _MIB),      # 64 MiB VMEM; ridge ~620 FLOP/B
    "unknown": (256, 256, 46 * _MIB),  # conservative
}


def _tpu_generation():
    try:
        kind = jax.devices()[0].device_kind.lower()
    except Exception:
        return "unknown"
    if "v5 lite" in kind or "v5e" in kind or "v5litepod" in kind:
        return "v5e"
    if "v6" in kind:
        return "v6e"
    if "v7" in kind or "7x" in kind:
        return "v7x"
    return "unknown"


def _gen_config(generation=None):
    gen = generation if generation is not None else _tpu_generation()
    tm_t, tk_t, budget = _GEN_TABLE.get(gen, _GEN_TABLE["unknown"])
    # Refine the budget from the actual chip when the query is available.
    try:
        cap = getattr(pltpu.get_tpu_info(), "vmem_capacity_bytes", None)
        if cap:
            budget = min(budget, int(cap * 0.72))
    except Exception:
        pass
    return gen, tm_t, tk_t, budget


# --------------------------------------------------------------------------
# Kernels
# --------------------------------------------------------------------------
def _mlp_glu_kernel(x_ref, wgu_ref, wd_ref, o_ref, acc_ref, *, tk):
    # x_ref: (TM, H)   wgu_ref: (H, 2*TK) = [gate_k | up_k]   wd_ref: (TK, H)
    # o_ref: (TM, H)   acc_ref: (TM, H) f32 scratch, resident across k
    k = pl.program_id(1)

    @pl.when(k == 0)
    def _():
        acc_ref[...] = jnp.zeros_like(acc_ref)

    x = x_ref[...]                                           # compute dtype
    gu = jnp.dot(x, wgu_ref[...],
                 preferred_element_type=jnp.float32)         # (TM, 2*TK) f32
    gate = gu[:, :tk]                                        # lane-aligned split
    up = gu[:, tk:]
    h = (gate * jax.nn.sigmoid(gate)) * up                   # silu * up, f32
    acc_ref[...] += jnp.dot(h.astype(wd_ref.dtype), wd_ref[...],
                            preferred_element_type=jnp.float32)

    @pl.when(k == pl.num_programs(1) - 1)
    def _():
        o_ref[...] = acc_ref[...].astype(o_ref.dtype)


def _mlp_noglu_kernel(x_ref, wu_ref, wd_ref, o_ref, acc_ref):
    k = pl.program_id(1)

    @pl.when(k == 0)
    def _():
        acc_ref[...] = jnp.zeros_like(acc_ref)

    x = x_ref[...]
    up = jnp.dot(x, wu_ref[...], preferred_element_type=jnp.float32)
    h = up * jax.nn.sigmoid(up)                              # silu
    acc_ref[...] += jnp.dot(h.astype(wd_ref.dtype), wd_ref[...],
                            preferred_element_type=jnp.float32)

    @pl.when(k == pl.num_programs(1) - 1)
    def _():
        o_ref[...] = acc_ref[...].astype(o_ref.dtype)


# --------------------------------------------------------------------------
# One-time weight preparation (replaces the per-call .T transposes)
# --------------------------------------------------------------------------
def prepare_weights(params, *, glu_mlp=True, tk_target=None,
                    compute_dtype=jnp.bfloat16, generation=None):
    """Convert PyTorch-layout (out_features, in_features) weights into packed,
    per-k-contiguous, compute-dtype slabs.  Call once, reuse forever."""
    gen, _, tk_default, _ = _gen_config(generation)
    if tk_target is None:
        tk_target = tk_default

    wu = jnp.asarray(params["up_proj"])        # (I, H)
    wd = jnp.asarray(params["down_proj"])      # (H, I)
    inter, hidden = wu.shape

    # Lane-aligned reduction tile: always a multiple of 128.
    tk = min(_round_up(tk_target, 128), _round_up(inter, 128))
    i_pad = _round_up(inter, tk)
    nk = i_pad // tk

    def _pad_cols(w_t):                        # (H, I) -> (H, i_pad)
        return jnp.zeros((hidden, i_pad), compute_dtype).at[:, :inter].set(
            w_t.astype(compute_dtype))

    # down_proj -> (nk, tk, H): each k-slab is fully contiguous in HBM.
    # Zero-padded rows contribute nothing to the accumulation.
    wd_blocks = jnp.zeros((i_pad, hidden), compute_dtype).at[:inter].set(
        wd.T.astype(compute_dtype)).reshape(nk, tk, hidden)

    wu_blocks = _pad_cols(wu.T).reshape(hidden, nk, tk).transpose(1, 0, 2)

    meta = {"tk": tk, "hidden": hidden, "intermediate": inter,
            "glu_mlp": glu_mlp, "generation": gen}
    if glu_mlp:
        wg_blocks = _pad_cols(jnp.asarray(params["gate_proj"]).T
                              ).reshape(hidden, nk, tk).transpose(1, 0, 2)
        # (nk, H, 2*tk): per-k slab [gate_k | up_k] -> one contiguous DMA and
        # one MXU matmul per grid step.
        wgu = jnp.concatenate([wg_blocks, wu_blocks], axis=-1)
        return {"wgu": wgu, "wd": wd_blocks, **meta}
    return {"wu": wu_blocks, "wd": wd_blocks, **meta}


# --------------------------------------------------------------------------
# Forward
# --------------------------------------------------------------------------
def mlp_forward(x, prepared, *, tm_target=None, out_dtype=None,
                generation=None):
    """x: (B, S, H).  Returns (out, None) matching the PyTorch module."""
    B, S, H = x.shape
    assert H == prepared["hidden"]
    glu = prepared["glu_mlp"]
    tk = prepared["tk"]
    inter = prepared["intermediate"]
    wd = prepared["wd"]                         # (nk, tk, H)
    nk = wd.shape[0]
    compute_dtype = wd.dtype
    c_item = jnp.dtype(compute_dtype).itemsize
    out_dtype = out_dtype if out_dtype is not None else x.dtype
    o_item = jnp.dtype(out_dtype).itemsize

    gen, tm_default, _, budget = _gen_config(
        generation if generation is not None else prepared.get("generation"))
    if tm_target is None:
        tm_target = tm_default

    T = B * S
    tm = min(_round_up(tm_target, 8), _round_up(T, 8))
    if gen == "v7x" and T > 8:
        # Guarantee >=2 token tiles so both TensorCores get work.
        tm = min(tm, _round_up(-(-T // 2), 8))

    n_w_cols = 2 * tk if glu else tk

    def _vmem_usage(tm_):
        x_b = 2 * tm_ * H * c_item                 # double-buffered x tile
        out_b = 2 * tm_ * H * o_item               # double-buffered out tile
        acc_b = tm_ * H * 4                        # f32 accumulator scratch
        w_b = 2 * (H * n_w_cols + tk * H) * c_item  # double-buffered weights
        return x_b + out_b + acc_b + w_b + 2 * _MIB  # slack for internal scratch

    while tm > 8 and _vmem_usage(tm) > budget:
        tm = max(8, _round_up(tm // 2, 8))

    t_pad = _round_up(T, tm)
    x2d = x.reshape(T, H).astype(compute_dtype)
    if t_pad != T:
        x2d = jnp.zeros((t_pad, H), compute_dtype).at[:T].set(x2d)

    n_token_tiles = t_pad // tm
    grid = (n_token_tiles, nk)

    # Advisory cost estimate; weights are re-streamed once per token tile.
    w_first = prepared["wgu"] if glu else prepared["wu"]
    n_mm = 3 if glu else 2
    cost = pl.CostEstimate(
        flops=2 * T * H * inter * n_mm,
        transcendentals=T * inter,
        bytes_accessed=(x2d.size * c_item
                        + n_token_tiles * (w_first.size + wd.size) * c_item
                        + t_pad * H * o_item))

    compiler_params = pltpu.CompilerParams(
        dimension_semantics=("parallel", "arbitrary"),
        vmem_limit_bytes=int(min(budget + 8 * _MIB, 120 * _MIB)))

    if glu:
        kernel = functools.partial(_mlp_glu_kernel, tk=tk)
        in_specs = [
            pl.BlockSpec((tm, H), lambda i, k: (i, 0)),                       # x tile
            pl.BlockSpec((pl.Squeezed(), H, 2 * tk), lambda i, k: (k, 0, 0)),  # [g|u]_k
            pl.BlockSpec((pl.Squeezed(), tk, H), lambda i, k: (k, 0, 0)),      # down_k
        ]
        args = (x2d, prepared["wgu"], wd)
    else:
        kernel = _mlp_noglu_kernel
        in_specs = [
            pl.BlockSpec((tm, H), lambda i, k: (i, 0)),
            pl.BlockSpec((pl.Squeezed(), H, tk), lambda i, k: (k, 0, 0)),
            pl.BlockSpec((pl.Squeezed(), tk, H), lambda i, k: (k, 0, 0)),
        ]
        args = (x2d, prepared["wu"], wd)

    out2d = pl.pallas_call(
        kernel,
        out_shape=jax.ShapeDtypeStruct((t_pad, H), out_dtype),
        grid_spec=pltpu.PrefetchScalarGridSpec(
            num_scalar_prefetch=0,
            grid=grid,
            in_specs=in_specs,
            out_specs=pl.BlockSpec((tm, H), lambda i, k: (i, 0)),
            scratch_shapes=[pltpu.VMEM((tm, H), jnp.float32)],
        ),
        compiler_params=compiler_params,
        cost_estimate=cost,
    )(*args)

    return out2d[:T].reshape(B, S, H), None


# --------------------------------------------------------------------------
# Reference / init / test
# --------------------------------------------------------------------------
def init_params(key, hidden_size, intermediate_size, glu_mlp=True):
    # PyTorch-style (out_features, in_features) storage.
    k1, k2, k3 = jax.random.split(key, 3)
    s_in = 1.0 / jnp.sqrt(hidden_size)
    s_mid = 1.0 / jnp.sqrt(intermediate_size)
    params = {
        "up_proj": jax.random.uniform(
            k1, (intermediate_size, hidden_size), jnp.float32, -s_in, s_in),
        "down_proj": jax.random.uniform(
            k2, (hidden_size, intermediate_size), jnp.float32, -s_mid, s_mid),
    }
    if glu_mlp:
        params["gate_proj"] = jax.random.uniform(
            k3, (intermediate_size, hidden_size), jnp.float32, -s_in, s_in)
    return params


def mlp_reference(x, params, *, glu_mlp=True):
    hp = jax.lax.Precision.HIGHEST
    up = jnp.einsum("bsh,ih->bsi", x, params["up_proj"], precision=hp)
    if glu_mlp:
        gate = jnp.einsum("bsh,ih->bsi", x, params["gate_proj"], precision=hp)
        h = _silu(gate) * up
    else:
        h = _silu(up)
    return jnp.einsum("bsi,hi->bsh", h, params["down_proj"], precision=hp)


if __name__ == "__main__":
    key = jax.random.PRNGKey(0)
    ok = True

    # (batch, seq, hidden, intermediate, overrides) — second config forces a
    # multi-tile grid (2 token tiles x 2 reduction steps) to exercise the
    # accumulator init / finalize path regardless of chip generation.
    configs = [
        (2, 8, 32, 64, {}),
        (2, 8, 128, 256, {"tk_target": 128, "tm_target": 8}),
    ]

    for (batch, seq, hidden, intermediate, over) in configs:
        key, kx, kp = jax.random.split(key, 3)
        x = jax.random.normal(kx, (batch, seq, hidden), dtype=jnp.float32)

        for glu_mlp in (True, False):
            params = init_params(kp, hidden, intermediate, glu_mlp=glu_mlp)
            ref = mlp_reference(x, params, glu_mlp=glu_mlp)

            # f32 (tight tolerance) and bf16 (MXU production path) checks.
            for compute_dtype, atol, rtol in ((jnp.float32, 1e-3, 1e-3),
                                              (jnp.bfloat16, 2e-2, 5e-2)):
                prepared = prepare_weights(params, glu_mlp=glu_mlp,
                                           compute_dtype=compute_dtype,
                                           tk_target=over.get("tk_target"))
                out, aux = mlp_forward(x, prepared,
                                       tm_target=over.get("tm_target"))
                out = jax.block_until_ready(out)
                assert aux is None
                assert out.shape == (batch, seq, hidden)
                assert out.dtype == x.dtype
                if not jnp.allclose(out, ref, atol=atol, rtol=rtol):
                    ok = False

    if ok:
        print("KERNEL_OK")
</pallas_src>

<mosaic_0001>
module attributes {stable_mosaic.version = 11 : i64} {
  func.func @_mlp_glu_kernel(%arg0: i32, %arg1: i32, %arg2: memref<16x32xf32, #tpu.memory_space<vmem>>, %arg3: memref<1x32x256xf32, #tpu.memory_space<vmem>>, %arg4: memref<1x128x32xf32, #tpu.memory_space<vmem>>, %arg5: memref<16x32xf32, #tpu.memory_space<vmem>>, %arg6: memref<16x32xf32, #tpu.memory_space<vmem>>) attributes {dimension_semantics = [#tpu.dimension_semantics<parallel>, #tpu.dimension_semantics<arbitrary>], iteration_bounds = array<i64: 1, 1>, scalar_prefetch = 0 : i64, scratch_operands = 1 : i64, tpu.core_type = #tpu.core_type<tc>, window_params = [{transform_indices = @transform_0, window_bounds = array<i64: 16, 32>}, {transform_indices = @transform_1, window_bounds = array<i64: 1, 32, 256>}, {transform_indices = @transform_2, window_bounds = array<i64: 1, 128, 32>}, {transform_indices = @transform_3, window_bounds = array<i64: 16, 32>}]} {
    %c0_i32 = arith.constant 0 : i32
    %0 = arith.cmpi eq, %arg1, %c0_i32 : i32
    %1 = arith.extui %0 : i1 to i32
    %c0_i32_0 = arith.constant 0 : i32
    %2 = arith.cmpi ne, %1, %c0_i32_0 : i32
    scf.if %2 {
      %cst_16 = arith.constant 0.000000e+00 : f32
      %25 = vector.broadcast %cst_16 : f32 to vector<16x32xf32>
      %c0_17 = arith.constant 0 : index
      %c0_18 = arith.constant 0 : index
      %26 = vector.load %arg6[%c0_17, %c0_18] : memref<16x32xf32, #tpu.memory_space<vmem>>, vector<16x32xf32>
      tpu.vector_store %arg6[%c0_17, %c0_18], %25 {strides = array<i32>} : memref<16x32xf32, #tpu.memory_space<vmem>>, vector<16x32xf32>,
    } else {
    }
    %c0 = arith.constant 0 : index
    %c0_1 = arith.constant 0 : index
    %3 = vector.load %arg2[%c0, %c0_1] : memref<16x32xf32, #tpu.memory_space<vmem>>, vector<16x32xf32>
    %c0_2 = arith.constant 0 : index
    %c0_3 = arith.constant 0 : index
    %c0_4 = arith.constant 0 : index
    %4 = vector.load %arg3[%c0_2, %c0_3, %c0_4] : memref<1x32x256xf32, #tpu.memory_space<vmem>>, vector<1x32x256xf32>
    %5 = vector.shape_cast %4 : vector<1x32x256xf32> to vector<32x256xf32>
    %cst = arith.constant dense<0.000000e+00> : vector<16x256xf32>
    %6 = tpu.matmul %3, %5, %cst {dimension_numbers = #tpu.dot_dimension_numbers<[1], [0], [0], [1], [0, 0, 1, 1], [], []>} : vector<16x32xf32>, vector<32x256xf32>, vector<16x256xf32> -> vector<16x256xf32>
    %7 = vector.extract_strided_slice %6 {offsets = [0, 0], sizes = [16, 128], strides = [1, 1]} : vector<16x256xf32> to vector<16x128xf32>
    %8 = vector.extract_strided_slice %6 {offsets = [0, 128], sizes = [16, 128], strides = [1, 1]} : vector<16x256xf32> to vector<16x128xf32>
    %9 = arith.negf %7 : vector<16x128xf32>
    %10 = math.exp %9 : vector<16x128xf32>
    %cst_5 = arith.constant 1.000000e+00 : f32
    %11 = vector.broadcast %cst_5 : f32 to vector<16x128xf32>
    %12 = arith.addf %11, %10 : vector<16x128xf32>
    %13 = arith.divf %11, %12 : vector<16x128xf32>
    %14 = arith.mulf %7, %13 : vector<16x128xf32>
    %15 = arith.mulf %14, %8 : vector<16x128xf32>
    %c0_6 = arith.constant 0 : index
    %c0_7 = arith.constant 0 : index
    %16 = vector.load %arg6[%c0_6, %c0_7] : memref<16x32xf32, #tpu.memory_space<vmem>>, vector<16x32xf32>
    %c0_8 = arith.constant 0 : index
    %c0_9 = arith.constant 0 : index
    %c0_10 = arith.constant 0 : index
    %17 = vector.load %arg4[%c0_8, %c0_9, %c0_10] : memref<1x128x32xf32, #tpu.memory_space<vmem>>, vector<1x128x32xf32>
    %18 = vector.shape_cast %17 : vector<1x128x32xf32> to vector<128x32xf32>
    %cst_11 = arith.constant dense<0.000000e+00> : vector<16x32xf32>
    %19 = tpu.matmul %15, %18, %cst_11 {dimension_numbers = #tpu.dot_dimension_numbers<[1], [0], [0], [1], [0, 0, 1, 1], [], []>} : vector<16x128xf32>, vector<128x32xf32>, vector<16x32xf32> -> vector<16x32xf32>
    %20 = arith.addf %16, %19 : vector<16x32xf32>
    %c0_12 = arith.constant 0 : index
    %c0_13 = arith.constant 0 : index
    %21 = vector.load %arg6[%c0_12, %c0_13] : memref<16x32xf32, #tpu.memory_space<vmem>>, vector<16x32xf32>
    tpu.vector_store %arg6[%c0_12, %c0_13], %20 {strides = array<i32>} : memref<16x32xf32, #tpu.memory_space<vmem>>, vector<16x32xf32>,
    %c0_i32_14 = arith.constant 0 : i32
    %22 = arith.cmpi eq, %arg1, %c0_i32_14 : i32
    %23 = arith.extui %22 : i1 to i32
    %c0_i32_15 = arith.constant 0 : i32
    %24 = arith.cmpi ne, %23, %c0_i32_15 : i32
    scf.if %24 {
      %c0_16 = arith.constant 0 : index
      %c0_17 = arith.constant 0 : index
      %25 = vector.load %arg6[%c0_16, %c0_17] : memref<16x32xf32, #tpu.memory_space<vmem>>, vector<16x32xf32>
      %c0_18 = arith.constant 0 : index
      %c0_19 = arith.constant 0 : index
      %26 = vector.load %arg5[%c0_18, %c0_19] : memref<16x32xf32, #tpu.memory_space<vmem>>, vector<16x32xf32>
      tpu.vector_store %arg5[%c0_18, %c0_19], %25 {strides = array<i32>} : memref<16x32xf32, #tpu.memory_space<vmem>>, vector<16x32xf32>,
    } else {
    }
    return
  }
  func.func @transform_0(%arg0: i32, %arg1: i32) -> (i32, i32) {
    %c0_i32 = arith.constant 0 : i32
    %c0_i32_0 = arith.constant 0 : i32
    return %arg0, %c0_i32 : i32, i32
  }
  func.func @transform_1(%arg0: i32, %arg1: i32) -> (i32, i32, i32) {
    %c0_i32 = arith.constant 0 : i32
    %c0_i32_0 = arith.constant 0 : i32
    %c0_i32_1 = arith.constant 0 : i32
    return %arg1, %c0_i32, %c0_i32_0 : i32, i32, i32
  }
  func.func @transform_2(%arg0: i32, %arg1: i32) -> (i32, i32, i32) {
    %c0_i32 = arith.constant 0 : i32
    %c0_i32_0 = arith.constant 0 : i32
    %c0_i32_1 = arith.constant 0 : i32
    return %arg1, %c0_i32, %c0_i32_0 : i32, i32, i32
  }
  func.func @transform_3(%arg0: i32, %arg1: i32) -> (i32, i32) {
    %c0_i32 = arith.constant 0 : i32
    %c0_i32_0 = arith.constant 0 : i32
    return %arg0, %c0_i32 : i32, i32
  }
}

</mosaic_0001>

<llo_original>
// kernel: tpu_custom_call.1
$region0: #{tpu_custom_call.1}
  #allocation0 [shape = 'u32[]', space=smem, size = 0x4, offset = 0x4, fixed_abs, tag = 'smem constant byte address 0x4 - core index']
  #allocation1 [shape = 'u32[144,128]{1,0:T(1,128)}', space=vmem, size = 0x12000, scoped, tag = 'internal scratch']
  #allocation2 [shape = 'f32[16,32]{1,0:T(8,128)}', space=vmem, size = 0x2000, scoped, tag = 'scratch operand']
  %s0 = inlined_call_operand.vmem [shape: f32[16,32], index: 0, kind: input, shape index: {}]
  %s1 = inlined_call_operand.vmem [shape: f32[1,32,256], index: 1, kind: input, shape index: {}]
  %s2 = inlined_call_operand.vmem [shape: f32[1,128,32], index: 2, kind: input, shape index: {}]
  %s3 = inlined_call_operand.hbm [shape: f32[16,32], index: 3, kind: output, shape index: {}]
  %s4 = sld [smem:[#allocation0]]
  $region30: #{tpu_custom_call.1} parent=0
    _
  %s6 = ssub.s32 1, %s4
  %s7 = scalar_select 0, %s6, %s4
  $region1: #{tpu_custom_call.1} parent=0
    #allocation3 [shape = 'u8[8192]{0}', space=vmem, size = 0x2000, scoped, tag = 'output window, operand 0, single buffered']
    #allocation4 [shape = 's32[1]{0}', space=sflag, size = 0x4, scoped, tag = 'scoped memory for tpu_custom_call.1']
    %8 = vsyncpa [#allocation4], 0
    // Predicated region
    $region2: #{tpu_custom_call.1} parent=1 // pred_check
      _
    $region3: #{tpu_custom_call.1} parent=1 // pred_check_branch
      %10 = sbr.rel (0) target = $region5
    $region4: #{tpu_custom_call.1} parent=1 // pred_region
      _
    $region5: #{tpu_custom_call.1} parent=1 // pred_fallthru
      _
    // Predicated region
    $region6: #{tpu_custom_call.1} parent=1 // pred_check
      _
    $region7: #{tpu_custom_call.1} parent=1 // pred_check_branch
      %12 = sbr.rel (0) target = $region9
    $region8: #{tpu_custom_call.1} parent=1 // pred_region
      _
    $region9: #{tpu_custom_call.1} parent=1 // pred_fallthru
      _
    // Predicated region
    $region10: #{tpu_custom_call.1} parent=1 // pred_check
      _
    $region11: #{tpu_custom_call.1} parent=1 // pred_check_branch
      %14 = sbr.rel (0) target = $region13
    $region12: #{tpu_custom_call.1} parent=1 // pred_region
      _
    $region13: #{tpu_custom_call.1} parent=1 // pred_fallthru
      _
    %p15 = scmp.eq.s32.totalorder 0, 0
    // Predicated region
    $region14: #{tpu_custom_call.1} parent=1 // pred_check
      %p16 = pneg %p15
    $region15: #{tpu_custom_call.1} parent=1 // pred_check_branch
      %18 = sbr.rel (%p16) target = $region17
    $region16: #{tpu_custom_call.1} parent=1 // pred_region
      %vm19 = vcmask 261120
      %20 = vst.msk [vmem:[#allocation2] sm:$0xff] %vm19, 0.0
      %21 = vst.msk [vmem:[#allocation2 + $0x8] sm:$0xff] %vm19, 0.0
    $region17: #{tpu_custom_call.1} parent=1 // pred_fallthru
      _
    %v22 = vld [vmem:[%s0] sm:$0xff]
    %v23 = vld [vmem:[%s0 + $0x8] sm:$0xff]
    %v24 = vld [vmem:[%s1] sm:$0xff]
    %v25 = vld [vmem:[%s1 + $0x8] sm:$0xff]
    %v26 = vld [vmem:[%s1 + $0x10] sm:$0xff]
    %v27 = vld [vmem:[%s1 + $0x18] sm:$0xff]
    %v28 = vld [vmem:[%s1 + $0x20] sm:$0xff]
    %v29 = vld [vmem:[%s1 + $0x28] sm:$0xff]
    %v30 = vld [vmem:[%s1 + $0x30] sm:$0xff]
    %v31 = vld [vmem:[%s1 + $0x38] sm:$0xff]
    %vm32 = vcmask 261120
    %v34 = vsel %vm32, %v22, 0
    %v37 = vsel %vm32, %v23, 0
    %39 = vmatprep.subr.mxu0 0.0
    %40 = vmatpush1.msra.mxu0 0.0
    %41 = vmatprep.subr.mxu0 0.0
    %42 = vmatpush1.msra.mxu0 0.0
    %43 = vmatprep.subr.mxu0 0.0
    %44 = vmatpush1.msra.mxu0 0.0
    %45 = vmatprep.subr.mxu0 0.0
    %46 = vmatpush1.msra.mxu0 0.0
    %47 = vmatprep.subr.mxu0 0.0
    %48 = vmatpush1.msra.mxu0 0.0
    %49 = vmatprep.subr.mxu0 0.0
    %50 = vmatpush1.msra.mxu0 0.0
    %51 = vmatprep.subr.mxu0 0.0
    %52 = vmatpush1.msra.mxu0 0.0
    %53 = vmatprep.subr.mxu0 0.0
    %54 = vmatpush1.msra.mxu0 0.0
    %55 = vmatprep.subr.mxu0 0.0
    %56 = vmatpush1.msra.mxu0 0.0
    %57 = vmatprep.subr.mxu0 0.0
    %58 = vmatpush1.msra.mxu0 0.0
    %59 = vmatprep.subr.mxu0 0.0
    %60 = vmatpush1.msra.mxu0 0.0
    %61 = vmatprep.subr.mxu0 0.0
    %62 = vmatpush1.msra.mxu0 0.0
    %63 = vmatprep.subr.mxu0 %v31
    %64 = vmatpush1.msra.mxu0 %v30
    %65 = vmatprep.subr.mxu0 %v29
    %66 = vmatpush1.msra.mxu0 %v28
    %67 = vmatprep.subr.mxu0 %v27
    %68 = vmatpush1.msra.mxu0 %v26
    %69 = vmatprep.subr.mxu0 %v25
    %70 = vmatpush1.msra.mxu0 %v24
    %71 = vmatprep.subr.mxu0 0.0
    %72 = vmatpush2.msra.mxu0 0.0
    %73 = vmatprep.subr.mxu0 0.0
    %74 = vmatpush2.msra.mxu0 0.0
    %75 = vmatprep.subr.mxu0 0.0
    %76 = vmatpush2.msra.mxu0 0.0
    %77 = vmatprep.subr.mxu0 0.0
    %78 = vmatpush2.msra.mxu0 0.0
    %79 = vmatprep.subr.mxu0 0.0
    %80 = vmatpush2.msra.mxu0 0.0
    %81 = vmatprep.subr.mxu0 0.0
    %82 = vmatpush2.msra.mxu0 0.0
    %83 = vmatprep.subr.mxu0 0.0
    %84 = vmatpush2.msra.mxu0 0.0
    %85 = vmatprep.subr.mxu0 0.0
    %86 = vmatpush2.msra.mxu0 0.0
    %87 = vmatprep.subr.mxu0 0.0
    %88 = vmatpush2.msra.mxu0 0.0
    %89 = vmatprep.subr.mxu0 0.0
    %90 = vmatpush2.msra.mxu0 0.0
    %91 = vmatprep.subr.mxu0 0.0
    %92 = vmatpush2.msra.mxu0 0.0
    %93 = vmatprep.subr.mxu0 0.0
    %94 = vmatpush2.msra.mxu0 0.0
    %95 = vmatprep.subr.mxu0 0.0
    %96 = vmatpush2.msra.mxu0 0.0
    %97 = vmatprep.subr.mxu0 0.0
    %98 = vmatpush2.msra.mxu0 0.0
    %99 = vmatprep.subr.mxu0 0.0
    %100 = vmatpush2.msra.mxu0 0.0
    %101 = vmatprep.subr.mxu0 0.0
    %102 = vmatpush2.msra.mxu0 0.0
    %103 = vmatprep.mubr.f32.mxu0 0.0
    %104 = vmatmul.mubr.f32.gmra.mxu0 %v34
    %v105 = vpop.f32.mrf.mxu0
    %v106 = vadd.f32 0.0, %v105
    %v107 = vpop.f32.mrf.mxu0
    %v108 = vadd.f32 0.0, %v107
    %109 = vmatprep.mubr.f32.mxu0 0.0
    %110 = vmatmul.mubr.f32.gmra.mxu0 %v37
    %v111 = vpop.f32.mrf.mxu0
    %v112 = vadd.f32 0.0, %v111
    %v113 = vpop.f32.mrf.mxu0
    %v114 = vadd.f32 0.0, %v113
    %115 = vdwg.mxu0
    %v116 = vxor.u32 %v106, 2147483648
    %v117 = vxor.u32 %v112, 2147483648
    %v118 = vmul.f32 %v116, 1.442695
    %v119 = vpow.pop %v118
    %v120 = vmul.f32 %v117, 1.442695
    %v121 = vpow.pop %v120
    %v122 = vadd.f32 %v119, 1.0
    %v123 = vadd.f32 %v121, 1.0
    %v124 = vrcp.pop %v122
    %v125 = vmul.f32 1.0, %v124
    %v126 = vrcp.pop %v123
    %v127 = vmul.f32 1.0, %v126
    %v128 = vmul.f32 %v106, %v125
    %v129 = vmul.f32 %v112, %v127
    %v130 = vmul.f32 %v128, %v108
    %v131 = vmul.f32 %v129, %v114
    %v132 = vld [vmem:[#allocation2] sm:$0xff]
    %v133 = vld [vmem:[#allocation2 + $0x8] sm:$0xff]
    %v134 = vld [vmem:[%s2] sm:$0xff]
    %v135 = vld [vmem:[%s2 + $0x8] sm:$0xff]
    %v136 = vld [vmem:[%s2 + $0x10] sm:$0xff]
    %v137 = vld [vmem:[%s2 + $0x18] sm:$0xff]
    %v138 = vld [vmem:[%s2 + $0x20] sm:$0xff]
    %v139 = vld [vmem:[%s2 + $0x28] sm:$0xff]
    %v140 = vld [vmem:[%s2 + $0x30] sm:$0xff]
    %v141 = vld [vmem:[%s2 + $0x38] sm:$0xff]
    %v142 = vld [vmem:[%s2 + $0x40] sm:$0xff]
    %v143 = vld [vmem:[%s2 + $0x48] sm:$0xff]
    %v144 = vld [vmem:[%s2 + $0x50] sm:$0xff]
    %v145 = vld [vmem:[%s2 + $0x58] sm:$0xff]
    %v146 = vld [vmem:[%s2 + $0x60] sm:$0xff]
    %v147 = vld [vmem:[%s2 + $0x68] sm:$0xff]
    %v148 = vld [vmem:[%s2 + $0x70] sm:$0xff]
    %v149 = vld [vmem:[%s2 + $0x78] sm:$0xff]
    %150 = vmatprep.subr.mxu0 0.0
    %151 = vmatpush1.msra.mxu0 %v149
    %152 = vmatprep.subr.mxu0 0.0
    %153 = vmatpush1.msra.mxu0 %v148
    %154 = vmatprep.subr.mxu0 0.0
    %155 = vmatpush1.msra.mxu0 %v147
    %156 = vmatprep.subr.mxu0 0.0
    %157 = vmatpush1.msra.mxu0 %v146
    %158 = vmatprep.subr.mxu0 0.0
    %159 = vmatpush1.msra.mxu0 %v145
    %160 = vmatprep.subr.mxu0 0.0
    %161 = vmatpush1.msra.mxu0 %v144
    %162 = vmatprep.subr.mxu0 0.0
    %163 = vmatpush1.msra.mxu0 %v143
    %164 = vmatprep.subr.mxu0 0.0
    %165 = vmatpush1.msra.mxu0 %v142
    %166 = vmatprep.subr.mxu0 0.0
    %167 = vmatpush1.msra.mxu0 %v141
    %168 = vmatprep.subr.mxu0 0.0
    %169 = vmatpush1.msra.mxu0 %v140
    %170 = vmatprep.subr.mxu0 0.0
    %171 = vmatpush1.msra.mxu0 %v139
    %172 = vmatprep.subr.mxu0 0.0
    %173 = vmatpush1.msra.mxu0 %v138
    %174 = vmatprep.subr.mxu0 0.0
    %175 = vmatpush1.msra.mxu0 %v137
    %176 = vmatprep.subr.mxu0 0.0
    %177 = vmatpush1.msra.mxu0 %v136
    %178 = vmatprep.subr.mxu0 0.0
    %179 = vmatpush1.msra.mxu0 %v135
    %180 = vmatprep.subr.mxu0 0.0
    %181 = vmatpush1.msra.mxu0 %v134
    %182 = vmatprep.subr.mxu0 0.0
    %183 = vmatpush2.msra.mxu0 0.0
    %184 = vmatprep.subr.mxu0 0.0
    %185 = vmatpush2.msra.mxu0 0.0
    %186 = vmatprep.subr.mxu0 0.0
    %187 = vmatpush2.msra.mxu0 0.0
    %188 = vmatprep.subr.mxu0 0.0
    %189 = vmatpush2.msra.mxu0 0.0
    %190 = vmatprep.subr.mxu0 0.0
    %191 = vmatpush2.msra.mxu0 0.0
    %192 = vmatprep.subr.mxu0 0.0
    %193 = vmatpush2.msra.mxu0 0.0
    %194 = vmatprep.subr.mxu0 0.0
    %195 = vmatpush2.msra.mxu0 0.0
    %196 = vmatprep.subr.mxu0 0.0
    %197 = vmatpush2.msra.mxu0 0.0
    %198 = vmatprep.subr.mxu0 0.0
    %199 = vmatpush2.msra.mxu0 0.0
    %200 = vmatprep.subr.mxu0 0.0
    %201 = vmatpush2.msra.mxu0 0.0
    %202 = vmatprep.subr.mxu0 0.0
    %203 = vmatpush2.msra.mxu0 0.0
    %204 = vmatprep.subr.mxu0 0.0
    %205 = vmatpush2.msra.mxu0 0.0
    %206 = vmatprep.subr.mxu0 0.0
    %207 = vmatpush2.msra.mxu0 0.0
    %208 = vmatprep.subr.mxu0 0.0
    %209 = vmatpush2.msra.mxu0 0.0
    %210 = vmatprep.subr.mxu0 0.0
    %211 = vmatpush2.msra.mxu0 0.0
    %212 = vmatprep.subr.mxu0 0.0
    %213 = vmatpush2.msra.mxu0 0.0
    %214 = vmatprep.mubr.f32.mxu0 0.0
    %215 = vmatmul.mubr.f32.gmra.mxu0 %v130
    %v216 = vpop.f32.mrf.mxu0
    %v217 = vadd.f32 0.0, %v216
    %v218 = vpop.f32.mrf.mxu0
    %219 = vmatprep.mubr.f32.mxu0 0.0
    %220 = vmatmul.mubr.f32.gmra.mxu0 %v131
    %v221 = vpop.f32.mrf.mxu0
    %v222 = vadd.f32 0.0, %v221
    %v223 = vpop.f32.mrf.mxu0
    %224 = vdwg.mxu0
    %v225 = vadd.f32 %v132, %v217
    %v226 = vadd.f32 %v133, %v222
    %227 = vst.msk [vmem:[#allocation2] sm:$0xff] %vm32, %v225
    %228 = vst.msk [vmem:[#allocation2 + $0x8] sm:$0xff] %vm32, %v226
    // Predicated region
    $region18: #{tpu_custom_call.1} parent=1 // pred_check
      %p229 = pneg %p15
    $region19: #{tpu_custom_call.1} parent=1 // pred_check_branch
      %231 = sbr.rel (%p229) target = $region21
    $region20: #{tpu_custom_call.1} parent=1 // pred_region
      %v232 = vld [vmem:[#allocation2] sm:$0xff]
      %v233 = vld [vmem:[#allocation2 + $0x8] sm:$0xff]
      %234 = vst.msk [vmem:[#allocation3] sm:$0xff] %vm32, %v232
      %235 = vst.msk [vmem:[#allocation3 + $0x8] sm:$0xff] %vm32, %v233
    $region21: #{tpu_custom_call.1} parent=1 // pred_fallthru
      _
    // Predicated region
    $region22: #{tpu_custom_call.1} parent=1 // pred_check
      _
    $region23: #{tpu_custom_call.1} parent=1 // pred_check_branch
      %237 = sbr.rel (0) target = $region25
    $region24: #{tpu_custom_call.1} parent=1 // pred_region
      %s239 = ssub.s32 256, 256
      %240 = vsyncadd [#allocation4], %s239
      %s241 = sshll.u32 [#allocation3], 4
      %s242 = int_to_ptr.vmem [resolvable:$true] %s241
      %247 = dma.vmem_to_hbm [thread:$0]  %s242, 256, %s3, [#allocation4], 128, 128, 8
    $region25: #{tpu_custom_call.1} parent=1 // pred_fallthru
      _
    // Predicated region
    $region26: #{tpu_custom_call.1} parent=1 // pred_check
      _
    $region27: #{tpu_custom_call.1} parent=1 // pred_check_branch
      %249 = sbr.rel (0) target = $region29
    $region28: #{tpu_custom_call.1} parent=1 // pred_region
      %250 = dma.done [#allocation4], 256
    $region29: #{tpu_custom_call.1} parent=1 // pred_fallthru
      _
    %251 = vsyncpa [#allocation4], 1

</llo_original>
